<compile_context>
chip_gen: v7x
topology: tpu7x:2x2x1
jax: 0.10.0
libtpu: 0.0.40
codegen_flags: <defaults>
</compile_context>

<pallas_src>
import math
from functools import partial
from typing import NamedTuple

import numpy as np
import jax
import jax.numpy as jnp
from jax.experimental import pallas as pl
from jax.experimental.pallas import tpu as pltpu


def _round_up(x: int, m: int) -> int:
    return ((x + m - 1) // m) * m


def _sigmoid1(x):
    # sigmoid(x) == 0.5 * (tanh(x / 2) + 1): a single EUP transcendental
    # (vs. exp + reciprocal), important on v5e's lone EUP.
    return 0.5 * (jnp.tanh(0.5 * x) + 1.0)


def _vmem_limit_bytes(block_bytes: int) -> int:
    # Actual double-buffered working set + 50% headroom, clamped to fit the
    # smallest per-core VMEM (v7x: 64 MiB).
    return int(min(60 * 1024 * 1024, max(16 * 1024 * 1024, block_bytes * 3 // 2)))


# ---------------------------------------------------------------------------
# Kernels
# ---------------------------------------------------------------------------

def _fused_gated_matmul_kernel(x_ref, wwt_ref, wmt_ref, bw_ref, bm_ref,
                               o_ref, acc_ref, *, mxu_dtype):
    """acc += x @ (sigmoid(WM.T) * WW.T); gated-bias add + store at last k."""
    k = pl.program_id(2)

    @pl.when(k == 0)
    def _():
        acc_ref[...] = jnp.zeros_like(acc_ref)

    # Gate the shared weight tile (VPU + EUP filler under the MXU). Blocks are
    # already (tk, tn): no in-kernel transpose.
    w_eff = (_sigmoid1(wmt_ref[...]) * wwt_ref[...]).astype(mxu_dtype)    # (tk, tn)
    acc_ref[...] += jnp.dot(x_ref[...].astype(mxu_dtype), w_eff,
                            preferred_element_type=jnp.float32)           # (tm, tn)

    @pl.when(k == pl.num_programs(2) - 1)
    def _():
        b_eff = _sigmoid1(bm_ref[...]) * bw_ref[...]                      # (1, tn)
        o_ref[...] = (acc_ref[...] + b_eff).astype(o_ref.dtype)


def _gate_weights_kernel(ww_ref, wm_ref, o_ref):
    """W_eff = sigmoid(WM) * WW, written once to HBM (optionally downcast)."""
    o_ref[...] = (_sigmoid1(wm_ref[...]) * ww_ref[...]).astype(o_ref.dtype)


def _matmul_bias_kernel(x_ref, w_ref, b_ref, o_ref, acc_ref, *, mxu_dtype):
    """acc += x @ W_eff (single weight stream); precomputed bias at last k."""
    k = pl.program_id(2)

    @pl.when(k == 0)
    def _():
        acc_ref[...] = jnp.zeros_like(acc_ref)

    acc_ref[...] += jnp.dot(x_ref[...].astype(mxu_dtype), w_ref[...],
                            preferred_element_type=jnp.float32)

    @pl.when(k == pl.num_programs(2) - 1)
    def _():
        o_ref[...] = (acc_ref[...] + b_ref[...]).astype(o_ref.dtype)


# ---------------------------------------------------------------------------
# Parameter packing (hoisted out of the per-call hot path)
# ---------------------------------------------------------------------------

class GatedLinearParams(NamedTuple):
    wwT: jax.Array        # (Kp, Np) padded WW.T   -> MXU-natural (K, N) layout
    wmT: jax.Array        # (Kp, Np) padded WM.T
    bW: jax.Array         # (1, Np)
    bM: jax.Array         # (1, Np)
    in_features: int
    out_features: int
    tn: int
    tk: int


def prepare_gated_linear(WW, WM, bW, bM, *, tn=512, tk=512) -> GatedLinearParams:
    """One-time packing per (shared weights, task mask) pair."""
    out_f, in_f = WW.shape
    tn = min(tn, _round_up(out_f, 128))
    tk = min(tk, _round_up(in_f, 128))
    Kp = _round_up(in_f, tk)
    Np = _round_up(out_f, tn)

    wwT = WW.T
    wmT = WM.T
    bW2 = bW.reshape(1, out_f)
    bM2 = bM.reshape(1, out_f)
    # Zero padding: padded K rows contribute sigmoid(0)*0 = 0; padded N cols
    # and padded batch rows are sliced off in gated_linear().
    if (Kp, Np) != (in_f, out_f):
        wwT = jnp.pad(wwT, ((0, Kp - in_f), (0, Np - out_f)))
        wmT = jnp.pad(wmT, ((0, Kp - in_f), (0, Np - out_f)))
    if Np != out_f:
        bW2 = jnp.pad(bW2, ((0, 0), (0, Np - out_f)))
        bM2 = jnp.pad(bM2, ((0, 0), (0, Np - out_f)))
    return GatedLinearParams(wwT, wmT, bW2, bM2, in_f, out_f, tn, tk)


# ---------------------------------------------------------------------------
# pallas_call wrappers
# ---------------------------------------------------------------------------

def _precompute_w_eff(params: GatedLinearParams, mxu_dtype):
    Kp, Np = params.wwT.shape
    tk, tn = params.tk, params.tn
    w_isz = params.wwT.dtype.itemsize
    o_isz = np.dtype(mxu_dtype).itemsize
    block_bytes = 2 * (2 * tk * tn * w_isz + tk * tn * o_isz)
    cost = pl.CostEstimate(
        flops=3 * Kp * Np,
        transcendentals=Kp * Np,
        bytes_accessed=2 * Kp * Np * w_isz + Kp * Np * o_isz,
    )
    return pl.pallas_call(
        _gate_weights_kernel,
        out_shape=jax.ShapeDtypeStruct((Kp, Np), mxu_dtype),
        grid_spec=pltpu.PrefetchScalarGridSpec(
            num_scalar_prefetch=0,
            grid=(Kp // tk, Np // tn),
            in_specs=[
                pl.BlockSpec((tk, tn), lambda k, j: (k, j)),      # WW.T
                pl.BlockSpec((tk, tn), lambda k, j: (k, j)),      # WM.T
            ],
            out_specs=pl.BlockSpec((tk, tn), lambda k, j: (k, j)),
        ),
        compiler_params=pltpu.CompilerParams(
            dimension_semantics=("parallel", "parallel"),
            vmem_limit_bytes=_vmem_limit_bytes(block_bytes),
        ),
        cost_estimate=cost,
    )(params.wwT, params.wmT)


def _matmul_bias(x_pad, w_eff, b_eff, *, tm, tn, tk, mxu_dtype, out_dtype):
    Bp, Kp = x_pad.shape
    _, Np = w_eff.shape
    n_i, n_j = Bp // tm, Np // tn
    xb = tm * tk * x_pad.dtype.itemsize
    wb = tk * tn * w_eff.dtype.itemsize
    ob = tm * tn * np.dtype(out_dtype).itemsize
    block_bytes = 2 * (xb + wb + ob) + tm * tn * 4
    cost = pl.CostEstimate(
        flops=2 * Bp * Kp * Np + Bp * Np,
        transcendentals=0,
        bytes_accessed=(Bp * Kp * x_pad.dtype.itemsize * n_j
                        + Kp * Np * w_eff.dtype.itemsize * n_i
                        + Bp * Np * np.dtype(out_dtype).itemsize
                        + Np * 4),
    )
    return pl.pallas_call(
        partial(_matmul_bias_kernel, mxu_dtype=mxu_dtype),
        out_shape=jax.ShapeDtypeStruct((Bp, Np), out_dtype),
        grid_spec=pltpu.PrefetchScalarGridSpec(
            num_scalar_prefetch=0,
            grid=(Bp // tm, Np // tn, Kp // tk),
            in_specs=[
                pl.BlockSpec((tm, tk), lambda i, j, k: (i, k)),   # x
                pl.BlockSpec((tk, tn), lambda i, j, k: (k, j)),   # W_eff
                pl.BlockSpec((1, tn), lambda i, j, k: (0, j)),    # b_eff
            ],
            out_specs=pl.BlockSpec((tm, tn), lambda i, j, k: (i, j)),
            scratch_shapes=[pltpu.VMEM((tm, tn), jnp.float32)],
        ),
        compiler_params=pltpu.CompilerParams(
            dimension_semantics=("parallel", "parallel", "arbitrary"),
            vmem_limit_bytes=_vmem_limit_bytes(block_bytes),
        ),
        cost_estimate=cost,
    )(x_pad, w_eff, b_eff)


def _fused_gated_matmul(x_pad, params, *, tm, tn, tk, mxu_dtype, out_dtype):
    Bp, Kp = x_pad.shape
    _, Np = params.wwT.shape
    n_i, n_j = Bp // tm, Np // tn
    w_isz = params.wwT.dtype.itemsize
    xb = tm * tk * x_pad.dtype.itemsize
    wb = tk * tn * w_isz
    ob = tm * tn * np.dtype(out_dtype).itemsize
    block_bytes = 2 * (xb + 2 * wb + ob) + tm * tn * 4
    cost = pl.CostEstimate(
        flops=2 * Bp * Kp * Np + 3 * Kp * Np * n_i + Bp * Np + 3 * Np,
        transcendentals=Kp * Np * n_i + Np,        # gate recomputed per batch tile
        bytes_accessed=(Bp * Kp * x_pad.dtype.itemsize * n_j
                        + 2 * Kp * Np * w_isz * n_i
                        + Bp * Np * np.dtype(out_dtype).itemsize
                        + 2 * Np * 4),
    )
    return pl.pallas_call(
        partial(_fused_gated_matmul_kernel, mxu_dtype=mxu_dtype),
        out_shape=jax.ShapeDtypeStruct((Bp, Np), out_dtype),
        grid_spec=pltpu.PrefetchScalarGridSpec(
            num_scalar_prefetch=0,
            grid=(Bp // tm, Np // tn, Kp // tk),
            in_specs=[
                pl.BlockSpec((tm, tk), lambda i, j, k: (i, k)),   # x
                pl.BlockSpec((tk, tn), lambda i, j, k: (k, j)),   # WW.T
                pl.BlockSpec((tk, tn), lambda i, j, k: (k, j)),   # WM.T
                pl.BlockSpec((1, tn), lambda i, j, k: (0, j)),    # bW
                pl.BlockSpec((1, tn), lambda i, j, k: (0, j)),    # bM
            ],
            out_specs=pl.BlockSpec((tm, tn), lambda i, j, k: (i, j)),
            scratch_shapes=[pltpu.VMEM((tm, tn), jnp.float32)],
        ),
        compiler_params=pltpu.CompilerParams(
            dimension_semantics=("parallel", "parallel", "arbitrary"),
            vmem_limit_bytes=_vmem_limit_bytes(block_bytes),
        ),
        cost_estimate=cost,
    )(x_pad, params.wwT, params.wmT, params.bW, params.bM)


def gated_linear(x, params: GatedLinearParams, *, tm=512, mxu_dtype=None):
    """y = x @ (sigmoid(WM)*WW).T + sigmoid(bM)*bW, x: (..., in_features).

    mxu_dtype: dtype fed to the MXU (pass jnp.bfloat16 for the fast path on
    v5e/v6e/v7x); accumulation is always f32. Default keeps x's dtype.
    """
    in_f, out_f = params.in_features, params.out_features
    out_dtype = x.dtype
    lead = x.shape[:-1]
    x2 = x.reshape(-1, in_f)
    B = x2.shape[0]
    mxu_dtype = np.dtype(x2.dtype if mxu_dtype is None else mxu_dtype)

    tn, tk = params.tn, params.tk
    Kp, Np = params.wwT.shape

    # Larger batch tiles amortize weight streaming (HBM-bound regime).
    if B >= 1024:
        tm = max(tm, 1024)
    tm = min(tm, _round_up(B, 8))
    Bp = _round_up(B, tm)
    n_batch_tiles = Bp // tm

    if (Bp, Kp) != (B, in_f):
        x2 = jnp.pad(x2, ((0, Bp - B), (0, Kp - in_f)))

    if n_batch_tiles == 1:
        # Weights streamed once: fuse the gate into the matmul. If there is
        # only one output tile, split N so the parallel j axis can shard
        # across both v7x TensorCores.
        if Np // tn == 1 and tn >= 256 and (tn // 2) % 128 == 0:
            tn = tn // 2
        out = _fused_gated_matmul(x2, params, tm=tm, tn=tn, tk=tk,
                                  mxu_dtype=mxu_dtype, out_dtype=out_dtype)
    else:
        # Several batch tiles would re-stream (and re-gate) both weight
        # tensors per tile: precompute W_eff once (single weight stream after).
        w_eff = _precompute_w_eff(params, mxu_dtype)
        b_eff = (_sigmoid1(params.bM) * params.bW).astype(jnp.float32)
        out = _matmul_bias(x2, w_eff, b_eff, tm=tm, tn=tn, tk=tk,
                           mxu_dtype=mxu_dtype, out_dtype=out_dtype)

    out = out[:B, :out_f]
    return out.reshape(*lead, out_f)


# ---------------------------------------------------------------------------
# Deterministic parameter init mirroring GatedLinear.__init__ (n_tasks=1)
# ---------------------------------------------------------------------------

def make_params(key, in_features, out_features):
    k1, k2 = jax.random.split(key)
    # kaiming_uniform_(a=sqrt(5)) => bound = 1/sqrt(fan_in); module scales by 2.0
    bound_w = 1.0 / math.sqrt(in_features)
    WW = jax.random.uniform(k1, (out_features, in_features), jnp.float32,
                            -bound_w, bound_w) * 2.0
    bound_b = 1.0 / math.sqrt(in_features)
    bW = jax.random.uniform(k2, (out_features,), jnp.float32,
                            -bound_b, bound_b) * 2.0
    # task-0 masks are zeros => sigmoid(0) = 0.5 gate
    WM = jnp.zeros((out_features, in_features), jnp.float32)
    bM = jnp.zeros((out_features,), jnp.float32)
    return WW, WM, bW, bM


if __name__ == "__main__":
    key = jax.random.PRNGKey(0)
    in_features, out_features, batch = 32, 16, 8

    kx, kp, kx2 = jax.random.split(key, 3)
    x = jax.random.normal(kx, (batch, in_features), jnp.float32)
    WW, WM, bW, bM = make_params(kp, in_features, out_features)

    # Pure-JAX reference (module semantics).
    w_eff_ref = jax.nn.sigmoid(WM) * WW
    b_eff_ref = jax.nn.sigmoid(bM) * bW
    ref = lambda xx: xx @ w_eff_ref.T + b_eff_ref

    # One-time weight packing (transpose + pad hoisted out of the hot path).
    params = prepare_gated_linear(WW, WM, bW, bM)

    # 1) Fused path (single batch tile), f32 MXU, tight tolerance.
    y = jax.block_until_ready(gated_linear(x, params))
    assert y.shape == (batch, out_features)
    assert jnp.allclose(y, ref(x), atol=1e-5, rtol=1e-5)

    # 2) Precompute-W_eff path (multiple batch tiles via small tm), f32 MXU.
    x_big = jax.random.normal(kx2, (32, in_features), jnp.float32)
    y_big = jax.block_until_ready(gated_linear(x_big, params, tm=8))
    assert y_big.shape == (32, out_features)
    assert jnp.allclose(y_big, ref(x_big), atol=1e-5, rtol=1e-5)

    # 3) bf16-MXU fast path (f32 accumulation), looser tolerance.
    y_bf16 = jax.block_until_ready(gated_linear(x, params, mxu_dtype=jnp.bfloat16))
    assert jnp.allclose(y_bf16, ref(x), atol=5e-2, rtol=5e-2)

    print("KERNEL_OK")
</pallas_src>

<mosaic_0001>
module attributes {stable_mosaic.version = 11 : i64} {
  func.func @_fused_gated_matmul_kernel(%arg0: i32, %arg1: i32, %arg2: i32, %arg3: memref<8x128xf32, #tpu.memory_space<vmem>>, %arg4: memref<128x128xf32, #tpu.memory_space<vmem>>, %arg5: memref<128x128xf32, #tpu.memory_space<vmem>>, %arg6: memref<1x128xf32, #tpu.memory_space<vmem>>, %arg7: memref<1x128xf32, #tpu.memory_space<vmem>>, %arg8: memref<8x128xf32, #tpu.memory_space<vmem>>, %arg9: memref<8x128xf32, #tpu.memory_space<vmem>>) attributes {dimension_semantics = [#tpu.dimension_semantics<parallel>, #tpu.dimension_semantics<parallel>, #tpu.dimension_semantics<arbitrary>], iteration_bounds = array<i64: 1, 1, 1>, scalar_prefetch = 0 : i64, scratch_operands = 1 : i64, tpu.core_type = #tpu.core_type<tc>, window_params = [{transform_indices = @transform_0, window_bounds = array<i64: 8, 128>}, {transform_indices = @transform_1, window_bounds = array<i64: 128, 128>}, {transform_indices = @transform_2, window_bounds = array<i64: 128, 128>}, {transform_indices = @transform_3, window_bounds = array<i64: 1, 128>}, {transform_indices = @transform_4, window_bounds = array<i64: 1, 128>}, {transform_indices = @transform_5, window_bounds = array<i64: 8, 128>}]} {
    %c0_i32 = arith.constant 0 : i32
    %0 = arith.cmpi eq, %arg2, %c0_i32 : i32
    %1 = arith.extui %0 : i1 to i32
    %c0_i32_0 = arith.constant 0 : i32
    %2 = arith.cmpi ne, %1, %c0_i32_0 : i32
    scf.if %2 {
      %cst_15 = arith.constant 0.000000e+00 : f32
      %21 = vector.broadcast %cst_15 : f32 to vector<8x128xf32>
      %c0_16 = arith.constant 0 : index
      %c0_17 = arith.constant 0 : index
      %22 = vector.load %arg9[%c0_16, %c0_17] : memref<8x128xf32, #tpu.memory_space<vmem>>, vector<8x128xf32>
      tpu.vector_store %arg9[%c0_16, %c0_17], %21 {strides = array<i32>} : memref<8x128xf32, #tpu.memory_space<vmem>>, vector<8x128xf32>,
    } else {
    }
    %c0 = arith.constant 0 : index
    %c0_1 = arith.constant 0 : index
    %3 = vector.load %arg5[%c0, %c0_1] : memref<128x128xf32, #tpu.memory_space<vmem>>, vector<128x128xf32>
    %cst = arith.constant 5.000000e-01 : f32
    %4 = vector.broadcast %cst : f32 to vector<128x128xf32>
    %5 = arith.mulf %4, %3 : vector<128x128xf32>
    %6 = math.tanh %5 : vector<128x128xf32>
    %cst_2 = arith.constant 1.000000e+00 : f32
    %7 = vector.broadcast %cst_2 : f32 to vector<128x128xf32>
    %8 = arith.addf %6, %7 : vector<128x128xf32>
    %cst_3 = arith.constant 5.000000e-01 : f32
    %9 = vector.broadcast %cst_3 : f32 to vector<128x128xf32>
    %10 = arith.mulf %9, %8 : vector<128x128xf32>
    %c0_4 = arith.constant 0 : index
    %c0_5 = arith.constant 0 : index
    %11 = vector.load %arg4[%c0_4, %c0_5] : memref<128x128xf32, #tpu.memory_space<vmem>>, vector<128x128xf32>
    %12 = arith.mulf %10, %11 : vector<128x128xf32>
    %c0_6 = arith.constant 0 : index
    %c0_7 = arith.constant 0 : index
    %13 = vector.load %arg9[%c0_6, %c0_7] : memref<8x128xf32, #tpu.memory_space<vmem>>, vector<8x128xf32>
    %c0_8 = arith.constant 0 : index
    %c0_9 = arith.constant 0 : index
    %14 = vector.load %arg3[%c0_8, %c0_9] : memref<8x128xf32, #tpu.memory_space<vmem>>, vector<8x128xf32>
    %cst_10 = arith.constant dense<0.000000e+00> : vector<8x128xf32>
    %15 = tpu.matmul %14, %12, %cst_10 {dimension_numbers = #tpu.dot_dimension_numbers<[1], [0], [0], [1], [0, 0, 1, 1], [], []>} : vector<8x128xf32>, vector<128x128xf32>, vector<8x128xf32> -> vector<8x128xf32>
    %16 = arith.addf %13, %15 : vector<8x128xf32>
    %c0_11 = arith.constant 0 : index
    %c0_12 = arith.constant 0 : index
    %17 = vector.load %arg9[%c0_11, %c0_12] : memref<8x128xf32, #tpu.memory_space<vmem>>, vector<8x128xf32>
    tpu.vector_store %arg9[%c0_11, %c0_12], %16 {strides = array<i32>} : memref<8x128xf32, #tpu.memory_space<vmem>>, vector<8x128xf32>,
    %c0_i32_13 = arith.constant 0 : i32
    %18 = arith.cmpi eq, %arg2, %c0_i32_13 : i32
    %19 = arith.extui %18 : i1 to i32
    %c0_i32_14 = arith.constant 0 : i32
    %20 = arith.cmpi ne, %19, %c0_i32_14 : i32
    scf.if %20 {
      %c0_15 = arith.constant 0 : index
      %c0_16 = arith.constant 0 : index
      %21 = vector.load %arg7[%c0_15, %c0_16] : memref<1x128xf32, #tpu.memory_space<vmem>>, vector<1x128xf32>
      %cst_17 = arith.constant 5.000000e-01 : f32
      %22 = vector.broadcast %cst_17 : f32 to vector<1x128xf32>
      %23 = arith.mulf %22, %21 : vector<1x128xf32>
      %24 = math.tanh %23 : vector<1x128xf32>
      %cst_18 = arith.constant 1.000000e+00 : f32
      %25 = vector.broadcast %cst_18 : f32 to vector<1x128xf32>
      %26 = arith.addf %24, %25 : vector<1x128xf32>
      %cst_19 = arith.constant 5.000000e-01 : f32
      %27 = vector.broadcast %cst_19 : f32 to vector<1x128xf32>
      %28 = arith.mulf %27, %26 : vector<1x128xf32>
      %c0_20 = arith.constant 0 : index
      %c0_21 = arith.constant 0 : index
      %29 = vector.load %arg6[%c0_20, %c0_21] : memref<1x128xf32, #tpu.memory_space<vmem>>, vector<1x128xf32>
      %30 = arith.mulf %28, %29 : vector<1x128xf32>
      %c0_22 = arith.constant 0 : index
      %c0_23 = arith.constant 0 : index
      %31 = vector.load %arg9[%c0_22, %c0_23] : memref<8x128xf32, #tpu.memory_space<vmem>>, vector<8x128xf32>
      %32 = vector.broadcast %30 : vector<1x128xf32> to vector<8x128xf32>
      %33 = arith.addf %31, %32 : vector<8x128xf32>
      %c0_24 = arith.constant 0 : index
      %c0_25 = arith.constant 0 : index
      %34 = vector.load %arg8[%c0_24, %c0_25] : memref<8x128xf32, #tpu.memory_space<vmem>>, vector<8x128xf32>
      tpu.vector_store %arg8[%c0_24, %c0_25], %33 {strides = array<i32>} : memref<8x128xf32, #tpu.memory_space<vmem>>, vector<8x128xf32>,
    } else {
    }
    return
  }
  func.func @transform_0(%arg0: i32, %arg1: i32, %arg2: i32) -> (i32, i32) {
    %c0_i32 = arith.constant 0 : i32
    return %arg0, %arg2 : i32, i32
  }
  func.func @transform_1(%arg0: i32, %arg1: i32, %arg2: i32) -> (i32, i32) {
    %c0_i32 = arith.constant 0 : i32
    return %arg2, %arg1 : i32, i32
  }
  func.func @transform_2(%arg0: i32, %arg1: i32, %arg2: i32) -> (i32, i32) {
    %c0_i32 = arith.constant 0 : i32
    return %arg2, %arg1 : i32, i32
  }
  func.func @transform_3(%arg0: i32, %arg1: i32, %arg2: i32) -> (i32, i32) {
    %c0_i32 = arith.constant 0 : i32
    %c0_i32_0 = arith.constant 0 : i32
    return %c0_i32, %arg1 : i32, i32
  }
  func.func @transform_4(%arg0: i32, %arg1: i32, %arg2: i32) -> (i32, i32) {
    %c0_i32 = arith.constant 0 : i32
    %c0_i32_0 = arith.constant 0 : i32
    return %c0_i32, %arg1 : i32, i32
  }
  func.func @transform_5(%arg0: i32, %arg1: i32, %arg2: i32) -> (i32, i32) {
    %c0_i32 = arith.constant 0 : i32
    return %arg0, %arg1 : i32, i32
  }
}

</mosaic_0001>

<llo_original>
// kernel: tpu_custom_call.1
$region0: #{tpu_custom_call.1}
  #allocation0 [shape = 'u32[]', space=smem, size = 0x4, offset = 0x4, fixed_abs, tag = 'smem constant byte address 0x4 - core index']
  #allocation1 [shape = 'u32[144,128]{1,0:T(1,128)}', space=vmem, size = 0x12000, scoped, tag = 'internal scratch']
  #allocation2 [shape = 'f32[8,128]{1,0:T(8,128)}', space=vmem, size = 0x1000, scoped, tag = 'scratch operand']
  %s0 = inlined_call_operand.hbm [shape: f32[8,128], index: 0, kind: input, shape index: {}]
  %s1 = inlined_call_operand.hbm [shape: f32[128,128], index: 1, kind: input, shape index: {}]
  %s2 = inlined_call_operand.hbm [shape: f32[128,128], index: 2, kind: input, shape index: {}]
  %s3 = inlined_call_operand.vmem [shape: f32[1,128], index: 3, kind: input, shape index: {}]
  %s4 = inlined_call_operand.vmem [shape: f32[1,128], index: 4, kind: input, shape index: {}]
  %s5 = inlined_call_operand.hbm [shape: f32[8,128], index: 5, kind: output, shape index: {}]
  %s6 = sld [smem:[#allocation0]]
  $region50: #{tpu_custom_call.1} parent=0
    _
  %s8 = ssub.s32 1, %s6
  %s9 = scalar_select 0, %s8, %s6
  $region1: #{tpu_custom_call.1} parent=0
    #allocation3 [shape = 'u8[4096]{0}', space=vmem, size = 0x1000, scoped, tag = 'input window, operand 0, single buffered']
    #allocation4 [shape = 's32[1]{0}', space=sflag, size = 0x4, scoped, tag = 'scoped memory for tpu_custom_call.1']
    #allocation5 [shape = 's32[1]{0}', space=sflag, size = 0x4, scoped, tag = 'scoped memory for tpu_custom_call.1']
    #allocation6 [shape = 'u8[65536]{0}', space=vmem, size = 0x10000, scoped, tag = 'input window, operand 1, single buffered']
    #allocation7 [shape = 's32[1]{0}', space=sflag, size = 0x4, scoped, tag = 'scoped memory for tpu_custom_call.1']
    #allocation8 [shape = 'u8[65536]{0}', space=vmem, size = 0x10000, scoped, tag = 'input window, operand 2, single buffered']
    #allocation9 [shape = 'u8[4096]{0}', space=vmem, size = 0x1000, scoped, tag = 'output window, operand 0, single buffered']
    %10 = vsyncpa [#allocation4], 0
    %11 = vsyncpa [#allocation7], 0
    %12 = vsyncpa [#allocation5], 0
    // Predicated region
    $region2: #{tpu_custom_call.1} parent=1 // pred_check
      _
    $region3: #{tpu_custom_call.1} parent=1 // pred_check_branch
      %14 = sbr.rel (0) target = $region5
    $region4: #{tpu_custom_call.1} parent=1 // pred_region
      %s16 = ssub.s32 128, 128
      %17 = vsyncadd [#allocation4], %s16
      %s19 = sshll.u32 [#allocation3], 4
      %s20 = int_to_ptr.vmem [resolvable:$true] %s19
      %22 = dma.hbm_to_vmem [thread:$0]  %s0, 128, %s20, [#allocation4]
    $region5: #{tpu_custom_call.1} parent=1 // pred_fallthru
      _
    // Predicated region
    $region6: #{tpu_custom_call.1} parent=1 // pred_check
      _
    $region7: #{tpu_custom_call.1} parent=1 // pred_check_branch
      %24 = sbr.rel (0) target = $region9
    $region8: #{tpu_custom_call.1} parent=1 // pred_region
      %s26 = ssub.s32 2048, 2048
      %27 = vsyncadd [#allocation7], %s26
      %s28 = sshll.u32 [#allocation6], 4
      %s29 = int_to_ptr.vmem [resolvable:$true] %s28
      %34 = dma.hbm_to_vmem [thread:$0]  %s1, 2048, %s29, [#allocation7], 128, 128, 8
    $region9: #{tpu_custom_call.1} parent=1 // pred_fallthru
      _
    // Predicated region
    $region10: #{tpu_custom_call.1} parent=1 // pred_check
      _
    $region11: #{tpu_custom_call.1} parent=1 // pred_check_branch
      %36 = sbr.rel (0) target = $region13
    $region12: #{tpu_custom_call.1} parent=1 // pred_region
      %s38 = ssub.s32 2048, 2048
      %39 = vsyncadd [#allocation7], %s38
      %s40 = sshll.u32 [#allocation8], 4
      %s41 = int_to_ptr.vmem [resolvable:$true] %s40
      %46 = dma.hbm_to_vmem [thread:$0]  %s2, 2048, %s41, [#allocation7], 128, 128, 8
    $region13: #{tpu_custom_call.1} parent=1 // pred_fallthru
      _
    // Predicated region
    $region14: #{tpu_custom_call.1} parent=1 // pred_check
      _
    $region15: #{tpu_custom_call.1} parent=1 // pred_check_branch
      %48 = sbr.rel (0) target = $region17
    $region16: #{tpu_custom_call.1} parent=1 // pred_region
      _
    $region17: #{tpu_custom_call.1} parent=1 // pred_fallthru
      _
    // Predicated region
    $region18: #{tpu_custom_call.1} parent=1 // pred_check
      _
    $region19: #{tpu_custom_call.1} parent=1 // pred_check_branch
      %50 = sbr.rel (0) target = $region21
    $region20: #{tpu_custom_call.1} parent=1 // pred_region
      _
    $region21: #{tpu_custom_call.1} parent=1 // pred_fallthru
      _
    // Predicated region
    $region22: #{tpu_custom_call.1} parent=1 // pred_check
      _
    $region23: #{tpu_custom_call.1} parent=1 // pred_check_branch
      %52 = sbr.rel (0) target = $region25
    $region24: #{tpu_custom_call.1} parent=1 // pred_region
      %53 = dma.done [#allocation4], 128
    $region25: #{tpu_custom_call.1} parent=1 // pred_fallthru
      _
    // Predicated region
    $region26: #{tpu_custom_call.1} parent=1 // pred_check
      _
    $region27: #{tpu_custom_call.1} parent=1 // pred_check_branch
      %55 = sbr.rel (0) target = $region29
    $region28: #{tpu_custom_call.1} parent=1 // pred_region
      %56 = dma.done [#allocation7], 2048
    $region29: #{tpu_custom_call.1} parent=1 // pred_fallthru
      _
    // Predicated region
    $region30: #{tpu_custom_call.1} parent=1 // pred_check
      _
    $region31: #{tpu_custom_call.1} parent=1 // pred_check_branch
      %58 = sbr.rel (0) target = $region33
    $region32: #{tpu_custom_call.1} parent=1 // pred_region
      %59 = dma.done [#allocation7], 2048
    $region33: #{tpu_custom_call.1} parent=1 // pred_fallthru
      _
    %p60 = scmp.eq.s32.totalorder 0, 0
    // Predicated region
    $region34: #{tpu_custom_call.1} parent=1 // pred_check
      %p61 = pneg %p60
    $region35: #{tpu_custom_call.1} parent=1 // pred_check_branch
      %63 = sbr.rel (%p61) target = $region37
    $region36: #{tpu_custom_call.1} parent=1 // pred_region
      %64 = vst [vmem:[#allocation2] sm:$0xff] 0.0
    $region37: #{tpu_custom_call.1} parent=1 // pred_fallthru
      _
    %v65 = vld [vmem:[#allocation8] sm:$0xff]
    %v66 = vld [vmem:[#allocation8 + $0x8] sm:$0xff]
    %v67 = vld [vmem:[#allocation8 + $0x10] sm:$0xff]
    %v68 = vld [vmem:[#allocation8 + $0x18] sm:$0xff]
    %v69 = vld [vmem:[#allocation8 + $0x20] sm:$0xff]
    %v70 = vld [vmem:[#allocation8 + $0x28] sm:$0xff]
    %v71 = vld [vmem:[#allocation8 + $0x30] sm:$0xff]
    %v72 = vld [vmem:[#allocation8 + $0x38] sm:$0xff]
    %v73 = vld [vmem:[#allocation8 + $0x40] sm:$0xff]
    %v74 = vld [vmem:[#allocation8 + $0x48] sm:$0xff]
    %v75 = vld [vmem:[#allocation8 + $0x50] sm:$0xff]
    %v76 = vld [vmem:[#allocation8 + $0x58] sm:$0xff]
    %v77 = vld [vmem:[#allocation8 + $0x60] sm:$0xff]
    %v78 = vld [vmem:[#allocation8 + $0x68] sm:$0xff]
    %v79 = vld [vmem:[#allocation8 + $0x70] sm:$0xff]
    %v80 = vld [vmem:[#allocation8 + $0x78] sm:$0xff]
    %v81 = vmul.f32 %v65, 0.5
    %v82 = vmul.f32 %v66, 0.5
    %v83 = vmul.f32 %v67, 0.5
    %v84 = vmul.f32 %v68, 0.5
    %v85 = vmul.f32 %v69, 0.5
    %v86 = vmul.f32 %v70, 0.5
    %v87 = vmul.f32 %v71, 0.5
    %v88 = vmul.f32 %v72, 0.5
    %v89 = vmul.f32 %v73, 0.5
    %v90 = vmul.f32 %v74, 0.5
    %v91 = vmul.f32 %v75, 0.5
    %v92 = vmul.f32 %v76, 0.5
    %v93 = vmul.f32 %v77, 0.5
    %v94 = vmul.f32 %v78, 0.5
    %v95 = vmul.f32 %v79, 0.5
    %v96 = vmul.f32 %v80, 0.5
    %v97 = vtanh.pop %v81
    %v98 = vtanh.pop %v82
    %v99 = vtanh.pop %v83
    %v100 = vtanh.pop %v84
    %v101 = vtanh.pop %v85
    %v102 = vtanh.pop %v86
    %v103 = vtanh.pop %v87
    %v104 = vtanh.pop %v88
    %v105 = vtanh.pop %v89
    %v106 = vtanh.pop %v90
    %v107 = vtanh.pop %v91
    %v108 = vtanh.pop %v92
    %v109 = vtanh.pop %v93
    %v110 = vtanh.pop %v94
    %v111 = vtanh.pop %v95
    %v112 = vtanh.pop %v96
    %v113 = vadd.f32 %v97, 1.0
    %v114 = vadd.f32 %v98, 1.0
    %v115 = vadd.f32 %v99, 1.0
    %v116 = vadd.f32 %v100, 1.0
    %v117 = vadd.f32 %v101, 1.0
    %v118 = vadd.f32 %v102, 1.0
    %v119 = vadd.f32 %v103, 1.0
    %v120 = vadd.f32 %v104, 1.0
    %v121 = vadd.f32 %v105, 1.0
    %v122 = vadd.f32 %v106, 1.0
    %v123 = vadd.f32 %v107, 1.0
    %v124 = vadd.f32 %v108, 1.0
    %v125 = vadd.f32 %v109, 1.0
    %v126 = vadd.f32 %v110, 1.0
    %v127 = vadd.f32 %v111, 1.0
    %v128 = vadd.f32 %v112, 1.0
    %v129 = vmul.f32 %v113, 0.5
    %v130 = vmul.f32 %v114, 0.5
    %v131 = vmul.f32 %v115, 0.5
    %v132 = vmul.f32 %v116, 0.5
    %v133 = vmul.f32 %v117, 0.5
    %v134 = vmul.f32 %v118, 0.5
    %v135 = vmul.f32 %v119, 0.5
    %v136 = vmul.f32 %v120, 0.5
    %v137 = vmul.f32 %v121, 0.5
    %v138 = vmul.f32 %v122, 0.5
    %v139 = vmul.f32 %v123, 0.5
    %v140 = vmul.f32 %v124, 0.5
    %v141 = vmul.f32 %v125, 0.5
    %v142 = vmul.f32 %v126, 0.5
    %v143 = vmul.f32 %v127, 0.5
    %v144 = vmul.f32 %v128, 0.5
    %v145 = vld [vmem:[#allocation6] sm:$0xff]
    %v146 = vld [vmem:[#allocation6 + $0x8] sm:$0xff]
    %v147 = vld [vmem:[#allocation6 + $0x10] sm:$0xff]
    %v148 = vld [vmem:[#allocation6 + $0x18] sm:$0xff]
    %v149 = vld [vmem:[#allocation6 + $0x20] sm:$0xff]
    %v150 = vld [vmem:[#allocation6 + $0x28] sm:$0xff]
    %v151 = vld [vmem:[#allocation6 + $0x30] sm:$0xff]
    %v152 = vld [vmem:[#allocation6 + $0x38] sm:$0xff]
    %v153 = vld [vmem:[#allocation6 + $0x40] sm:$0xff]
    %v154 = vld [vmem:[#allocation6 + $0x48] sm:$0xff]
    %v155 = vld [vmem:[#allocation6 + $0x50] sm:$0xff]
    %v156 = vld [vmem:[#allocation6 + $0x58] sm:$0xff]
    %v157 = vld [vmem:[#allocation6 + $0x60] sm:$0xff]
    %v158 = vld [vmem:[#allocation6 + $0x68] sm:$0xff]
    %v159 = vld [vmem:[#allocation6 + $0x70] sm:$0xff]
    %v160 = vld [vmem:[#allocation6 + $0x78] sm:$0xff]
    %v161 = vmul.f32 %v129, %v145
    %v162 = vmul.f32 %v130, %v146
    %v163 = vmul.f32 %v131, %v147
    %v164 = vmul.f32 %v132, %v148
    %v165 = vmul.f32 %v133, %v149
    %v166 = vmul.f32 %v134, %v150
    %v167 = vmul.f32 %v135, %v151
    %v168 = vmul.f32 %v136, %v152
    %v169 = vmul.f32 %v137, %v153
    %v170 = vmul.f32 %v138, %v154
    %v171 = vmul.f32 %v139, %v155
    %v172 = vmul.f32 %v140, %v156
    %v173 = vmul.f32 %v141, %v157
    %v174 = vmul.f32 %v142, %v158
    %v175 = vmul.f32 %v143, %v159
    %v176 = vmul.f32 %v144, %v160
    %v177 = vld [vmem:[#allocation2] sm:$0xff]
    %v178 = vld [vmem:[#allocation3] sm:$0xff]
    %179 = vmatprep.subr.mxu0 0.0
    %180 = vmatpush1.msra.mxu0 %v161
    %181 = vmatprep.subr.mxu0 0.0
    %182 = vmatpush1.msra.mxu0 %v162
    %183 = vmatprep.subr.mxu0 0.0
    %184 = vmatpush1.msra.mxu0 %v163
    %185 = vmatprep.subr.mxu0 0.0
    %186 = vmatpush1.msra.mxu0 %v164
    %187 = vmatprep.subr.mxu0 0.0
    %188 = vmatpush1.msra.mxu0 %v165
    %189 = vmatprep.subr.mxu0 0.0
    %190 = vmatpush1.msra.mxu0 %v166
    %191 = vmatprep.subr.mxu0 0.0
    %192 = vmatpush1.msra.mxu0 %v167
    %193 = vmatprep.subr.mxu0 0.0
    %194 = vmatpush1.msra.mxu0 %v168
    %195 = vmatprep.subr.mxu0 0.0
    %196 = vmatpush1.msra.mxu0 %v169
    %197 = vmatprep.subr.mxu0 0.0
    %198 = vmatpush1.msra.mxu0 %v170
    %199 = vmatprep.subr.mxu0 0.0
    %200 = vmatpush1.msra.mxu0 %v171
    %201 = vmatprep.subr.mxu0 0.0
    %202 = vmatpush1.msra.mxu0 %v172
    %203 = vmatprep.subr.mxu0 0.0
    %204 = vmatpush1.msra.mxu0 %v173
    %205 = vmatprep.subr.mxu0 0.0
    %206 = vmatpush1.msra.mxu0 %v174
    %207 = vmatprep.subr.mxu0 0.0
    %208 = vmatpush1.msra.mxu0 %v175
    %209 = vmatprep.subr.mxu0 0.0
    %210 = vmatpush1.msra.mxu0 %v176
    %211 = vmatprep.subr.mxu0 0.0
    %212 = vmatpush1.msra.mxu0 0.0
    %213 = vmatprep.subr.mxu0 0.0
    %214 = vmatpush1.msra.mxu0 0.0
    %215 = vmatprep.subr.mxu0 0.0
    %216 = vmatpush1.msra.mxu0 0.0
    %217 = vmatprep.subr.mxu0 0.0
    %218 = vmatpush1.msra.mxu0 0.0
    %219 = vmatprep.subr.mxu0 0.0
    %220 = vmatpush1.msra.mxu0 0.0
    %221 = vmatprep.subr.mxu0 0.0
    %222 = vmatpush1.msra.mxu0 0.0
    %223 = vmatprep.subr.mxu0 0.0
    %224 = vmatpush1.msra.mxu0 0.0
    %225 = vmatprep.subr.mxu0 0.0
    %226 = vmatpush1.msra.mxu0 0.0
    %227 = vmatprep.subr.mxu0 0.0
    %228 = vmatpush1.msra.mxu0 0.0
    %229 = vmatprep.subr.mxu0 0.0
    %230 = vmatpush1.msra.mxu0 0.0
    %231 = vmatprep.subr.mxu0 0.0
    %232 = vmatpush1.msra.mxu0 0.0
    %233 = vmatprep.subr.mxu0 0.0
    %234 = vmatpush1.msra.mxu0 0.0
    %235 = vmatprep.subr.mxu0 0.0
    %236 = vmatpush1.msra.mxu0 0.0
    %237 = vmatprep.subr.mxu0 0.0
    %238 = vmatpush1.msra.mxu0 0.0
    %239 = vmatprep.subr.mxu0 0.0
    %240 = vmatpush1.msra.mxu0 0.0
    %241 = vmatprep.subr.mxu0 0.0
    %242 = vmatpush1.msra.mxu0 0.0
    %243 = vmatprep.mubr.f32.mxu0 0.0
    %244 = vmatmul.mubr.f32.gmra.mrb[0].mxu0 %v178
    %v245 = vpop.f32.mrb[0].mxu0
    %v246 = vadd.f32 0.0, %v245
    %v247 = vpop.f32.mrb[0].mxu0
    %248 = vdwg.mxu0
    %v249 = vadd.f32 %v177, %v246
    %250 = vst [vmem:[#allocation2] sm:$0xff] %v249
    // Predicated region
    $region38: #{tpu_custom_call.1} parent=1 // pred_check
      %p251 = pneg %p60
    $region39: #{tpu_custom_call.1} parent=1 // pred_check_branch
      %253 = sbr.rel (%p251) target = $region41
    $region40: #{tpu_custom_call.1} parent=1 // pred_region
      %v254 = vld [vmem:[%s4] sm:$0x1]
      %v255 = vmul.f32 %v254, 0.5
      %v256 = vtanh.pop %v255
      %v257 = vadd.f32 %v256, 1.0
      %v258 = vmul.f32 %v257, 0.5
      %v259 = vld [vmem:[%s3] sm:$0x1]
      %v260 = vmul.f32 %v258, %v259
      %v261 = vld [vmem:[#allocation2] sm:$0xff]
      %v263 = vlaneseq
      %v264 = vshrl.u32 %v263, 7
      %v265 = vsub.s32 0, %v264
      %v266 = vrot.slane %v260, %v265
      %v268 = vadd.f32 %v261, %v266
      %269 = vst [vmem:[#allocation9] sm:$0xff] %v268
    $region41: #{tpu_custom_call.1} parent=1 // pred_fallthru
      _
    // Predicated region
    $region42: #{tpu_custom_call.1} parent=1 // pred_check
      _
    $region43: #{tpu_custom_call.1} parent=1 // pred_check_branch
      %271 = sbr.rel (0) target = $region45
    $region44: #{tpu_custom_call.1} parent=1 // pred_region
      %s273 = ssub.s32 128, 128
      %274 = vsyncadd [#allocation5], %s273
      %s276 = sshll.u32 [#allocation9], 4
      %s277 = int_to_ptr.vmem [resolvable:$true] %s276
      %279 = dma.vmem_to_hbm [thread:$0]  %s277, 128, %s5, [#allocation5]
    $region45: #{tpu_custom_call.1} parent=1 // pred_fallthru
      _
    // Predicated region
    $region46: #{tpu_custom_call.1} parent=1 // pred_check
      _
    $region47: #{tpu_custom_call.1} parent=1 // pred_check_branch
      %281 = sbr.rel (0) target = $region49
    $region48: #{tpu_custom_call.1} parent=1 // pred_region
      %282 = dma.done [#allocation5], 128
    $region49: #{tpu_custom_call.1} parent=1 // pred_fallthru
      _
    %283 = vsyncpa [#allocation4], 1
    %284 = vsyncpa [#allocation7], 1
    %285 = vsyncpa [#allocation5], 1

</llo_original>
